<compile_context>
chip_gen: v5e
topology: v5e:2x2
jax: 0.10.0
libtpu: 0.0.40
codegen_flags: <defaults>
</compile_context>

<pallas_src>
import functools
import math

import jax
import jax.numpy as jnp
from jax.experimental import pallas as pl
from jax.experimental.pallas import tpu as pltpu


# ----------------------------------------------------------------------------
# Host-side helpers: interpolation matrices & torchvision size semantics.
# ----------------------------------------------------------------------------
def _round_up(x: int, m: int) -> int:
    return (x + m - 1) // m * m


def _bilinear_matrix(in_size: int, out_size: int) -> jnp.ndarray:
    """R[out, in] s.t. out_vec = R @ in_vec is bilinear resize (half-pixel centers,
    align_corners=False, matches torch.nn.functional.interpolate, no antialias)."""
    scale = in_size / out_size
    rows = []
    for i in range(out_size):
        src = (i + 0.5) * scale - 0.5
        src = max(src, 0.0)                      # torch clamps negative source coords
        i0 = int(math.floor(src))
        i0 = min(i0, in_size - 1)
        i1 = min(i0 + 1, in_size - 1)
        w1 = src - i0
        w0 = 1.0 - w1
        row = [0.0] * in_size
        row[i0] += w0
        row[i1] += w1
        rows.append(row)
    return jnp.asarray(rows, dtype=jnp.float32)


def _resize_output_size(h: int, w: int, resize):
    """torchvision F.resize: int -> smaller edge = resize; long edge uses int()
    truncation (matches _compute_resized_output_size)."""
    if isinstance(resize, (tuple, list)):
        if len(resize) == 2:
            return int(resize[0]), int(resize[1])
        resize = int(resize[0])
    resize = int(resize)
    if h <= w:
        return resize, int(resize * w / h)
    return int(resize * h / w), resize


def _crop_hw(crop_size):
    if isinstance(crop_size, (tuple, list)):
        return int(crop_size[0]), int(crop_size[1])
    return int(crop_size), int(crop_size)


def _center_crop_offsets(rh: int, rw: int, ch: int, cw: int):
    top = int(round((rh - ch) / 2.0))
    left = int(round((rw - cw) / 2.0))
    return top, left


def _choose_group_size(n_imgs, h, w, ch_pad, cw_pad, in_itemsize, out_itemsize,
                       cd_itemsize, sub_in, sub_out,
                       vmem_budget_bytes=24 * 1024 * 1024,
                       max_group=64, min_steps=4):
    """Largest divisor G of n_imgs such that:
      * the grid keeps at least min_steps steps (pipelining + megacore sharding),
      * block shapes satisfy sublane-tiling divisibility,
      * padded (lane/sublane) VMEM usage incl. the f32 intermediate fits the budget.
    """
    w_pad = _round_up(w, 128)
    need_steps = min(min_steps, n_imgs)
    best = 1
    for g in range(1, min(n_imgs, max_group) + 1):
        if n_imgs % g:
            continue
        if (n_imgs // g) < need_steps:
            continue
        full = (g == n_imgs)
        if not full and ((g * h) % sub_in or (g * ch_pad) % sub_out):
            continue
        vmem = (
            2 * _round_up(g * h, sub_in) * w_pad * in_itemsize            # input blocks (dbl-buf)
            + 2 * _round_up(g * ch_pad, sub_out) * cw_pad * out_itemsize  # output blocks (dbl-buf)
            + g * ch_pad * w_pad * 4                                      # f32 intermediate scratch
            + _round_up(h, 8) * w_pad * max(cd_itemsize, 4)               # in-kernel cast slice headroom
            + 2 * _round_up(ch_pad, 8) * _round_up(h, 128) * cd_itemsize  # Ry_c
            + 2 * _round_up(w, 8) * cw_pad * 4                            # Rx_c^T (f32)
        )
        if vmem > vmem_budget_bytes:
            continue
        best = g
    return best


# ----------------------------------------------------------------------------
# Pallas kernel: per grid step, resample G images.
#   x_ref  : (G*H, W)          native dtype (G images stacked along rows)
#   ry_ref : (ch_pad, H)       compute dtype   (row crop folded in, zero-padded rows)
#   rxT_ref: (W, cw_pad)       float32         (col crop folded in, zero-padded lanes)
#   o_ref  : (G*ch_pad, cw_pad) output dtype   (lane-dense)
#   tmp_ref: (G*ch_pad, W)     float32 VMEM scratch (bounded per-image live ranges)
# ----------------------------------------------------------------------------
def _resize_crop_kernel(x_ref, ry_ref, rxT_ref, o_ref, tmp_ref, *,
                        group, h, ch_pad, compute_dtype):
    ry = ry_ref[...]                                            # (ch_pad, H), hoisted
    # H-direction resample per image (wide N = W); results staged into VMEM scratch
    # so the static Python loop does not keep every per-image value live.
    for g in range(group):
        xg = x_ref[g * h:(g + 1) * h, :].astype(compute_dtype)  # (H, W)
        tmp_ref[g * ch_pad:(g + 1) * ch_pad, :] = jnp.dot(
            ry, xg, preferred_element_type=jnp.float32)         # (ch_pad, W) f32
    # One flattened MXU matmul for the W-direction resample; single dense store.
    out = jnp.dot(tmp_ref[...], rxT_ref[...],
                  preferred_element_type=jnp.float32)           # (G*ch_pad, cw_pad)
    o_ref[...] = out.astype(o_ref.dtype)


# ----------------------------------------------------------------------------
# Wrapper
# ----------------------------------------------------------------------------
def transform_module_forward(data: jnp.ndarray, resize, crop_size, *,
                             group_size=None,
                             compute_dtype=None,
                             vmem_budget_bytes=24 * 1024 * 1024,
                             vmem_limit_bytes=48 * 1024 * 1024) -> jnp.ndarray:
    """data: [T, B, C, H, W] (any real dtype). Returns [T, B, C, crop_h, crop_w]."""
    T, B, C, H, W = data.shape
    rh, rw = _resize_output_size(H, W, resize)
    ch, cw = _crop_hw(crop_size)
    assert ch <= rh and cw <= rw, "crop larger than resized image not supported"
    top, left = _center_crop_offsets(rh, rw, ch, cw)

    out_dtype = data.dtype if jnp.issubdtype(data.dtype, jnp.floating) else jnp.float32
    if compute_dtype is None:
        # HBM-bound kernel: keep f32 inputs in f32 (no VPU pack casts; matters on
        # v5e which has no bf16 VPU); already-narrow inputs compute in bf16.
        compute_dtype = (jnp.float32 if jnp.dtype(data.dtype).itemsize >= 4
                         else jnp.bfloat16)

    in_itemsize = jnp.dtype(data.dtype).itemsize
    out_itemsize = jnp.dtype(out_dtype).itemsize
    cd_itemsize = jnp.dtype(compute_dtype).itemsize
    sub_in = max(8, 32 // in_itemsize)     # sublane tile for non-full input blocks
    sub_out = max(8, 32 // out_itemsize)   # sublane tile for non-full output blocks

    # Pad crop dims: cw -> 128-lane multiple (lane-dense output stores),
    # ch -> output sublane tile (aligned in-kernel stores / BlockSpec divisibility).
    ch_pad = _round_up(ch, sub_out)
    cw_pad = _round_up(cw, 128)

    # Interpolation matrices with the center crop folded in, zero-padded.
    ry_crop = _bilinear_matrix(H, rh)[top:top + ch]                     # (ch, H)
    rx_crop = _bilinear_matrix(W, rw)[left:left + cw]                   # (cw, W)
    ry = jnp.zeros((ch_pad, H), jnp.float32).at[:ch, :].set(ry_crop)
    ry = ry.astype(compute_dtype)                                       # (ch_pad, H)
    rxT = jnp.zeros((W, cw_pad), jnp.float32).at[:, :cw].set(rx_crop.T)  # (W, cw_pad) f32

    n_imgs = T * B * C
    if group_size is None:
        G = _choose_group_size(n_imgs, H, W, ch_pad, cw_pad,
                               in_itemsize, out_itemsize, cd_itemsize,
                               sub_in, sub_out,
                               vmem_budget_bytes=vmem_budget_bytes)
    else:
        G = int(group_size)
    assert n_imgs % G == 0, "group_size must divide T*B*C"

    # Free 2-D view (no data movement; native dtype stays in HBM).
    x2d = data.reshape(n_imgs * H, W)

    kernel = functools.partial(_resize_crop_kernel, group=G, h=H, ch_pad=ch_pad,
                               compute_dtype=compute_dtype)

    flops = int(2 * n_imgs * (ch_pad * H * W + ch_pad * W * cw_pad))
    bytes_accessed = int(n_imgs * H * W * in_itemsize
                         + n_imgs * ch_pad * cw_pad * out_itemsize
                         + ch_pad * H * cd_itemsize + W * cw_pad * 4)

    out2d = pl.pallas_call(
        kernel,
        out_shape=jax.ShapeDtypeStruct((n_imgs * ch_pad, cw_pad), out_dtype),
        grid_spec=pltpu.PrefetchScalarGridSpec(
            num_scalar_prefetch=0,
            grid=(n_imgs // G,),
            in_specs=[
                pl.BlockSpec((G * H, W), lambda i: (i, 0)),      # G images per step
                pl.BlockSpec((ch_pad, H), lambda i: (0, 0)),     # Ry_c   (VMEM-resident)
                pl.BlockSpec((W, cw_pad), lambda i: (0, 0)),     # Rx_c^T (VMEM-resident)
            ],
            out_specs=pl.BlockSpec((G * ch_pad, cw_pad), lambda i: (i, 0)),
            scratch_shapes=[pltpu.VMEM((G * ch_pad, W), jnp.float32)],
        ),
        compiler_params=pltpu.CompilerParams(
            dimension_semantics=("parallel",),
            vmem_limit_bytes=vmem_limit_bytes,
        ),
        cost_estimate=pl.CostEstimate(flops=flops, transcendentals=0,
                                      bytes_accessed=bytes_accessed),
    )(x2d, ry, rxT)

    out = out2d.reshape(T, B, C, ch_pad, cw_pad)[..., :ch, :cw]
    return out


# ----------------------------------------------------------------------------
# Pure-JAX reference (same math, float32, no Pallas).
# ----------------------------------------------------------------------------
def _reference(data, resize, crop_size):
    T, B, C, H, W = data.shape
    rh, rw = _resize_output_size(H, W, resize)
    ch, cw = _crop_hw(crop_size)
    top, left = _center_crop_offsets(rh, rw, ch, cw)
    ry = _bilinear_matrix(H, rh)[top:top + ch]
    rx = _bilinear_matrix(W, rw)[left:left + cw]
    imgs = data.reshape(T * B * C, H, W).astype(jnp.float32)
    out = jnp.einsum("oh,nhw,wp->nop", ry, imgs, rx.T,
                     precision=jax.lax.Precision.HIGHEST)
    return out.reshape(T, B, C, ch, cw)


if __name__ == "__main__":
    # Small, module-consistent shapes: 4 frames, batch 2, 3-channel 64x64 images,
    # resize smaller edge to 32, center-crop to 24.
    T, B, C, H, W = 4, 2, 3, 64, 64
    RESIZE, CROP = 32, 24

    key = jax.random.PRNGKey(0)
    data = jax.random.uniform(key, (T, B, C, H, W), dtype=jnp.float32)

    ref = _reference(data, RESIZE, CROP)

    # Explicit group size (grid of 6 steps, 4 images each), f32 compute path.
    out_f32 = transform_module_forward(data, RESIZE, CROP, group_size=4,
                                       compute_dtype=jnp.float32)
    out_f32 = jax.block_until_ready(out_f32)
    assert out_f32.shape == (T, B, C, CROP, CROP), out_f32.shape
    err_f32 = float(jnp.max(jnp.abs(out_f32 - ref)))
    assert err_f32 < 2e-2, f"f32 path max err {err_f32}"

    # Default path: auto group size (grid kept >= 4 steps), f32 compute for f32 input.
    out_auto = transform_module_forward(data, RESIZE, CROP)
    out_auto = jax.block_until_ready(out_auto)
    assert out_auto.shape == (T, B, C, CROP, CROP), out_auto.shape
    err_auto = float(jnp.max(jnp.abs(out_auto - ref)))
    assert err_auto < 2e-2, f"auto path max err {err_auto}"

    # bf16 compute path (bf16 operands for the first pass, f32 intermediate/accum).
    out_bf16 = transform_module_forward(data, RESIZE, CROP,
                                        compute_dtype=jnp.bfloat16)
    out_bf16 = jax.block_until_ready(out_bf16)
    assert out_bf16.shape == (T, B, C, CROP, CROP), out_bf16.shape
    err_bf16 = float(jnp.max(jnp.abs(out_bf16.astype(jnp.float32) - ref)))
    assert err_bf16 < 3e-2, f"bf16 path max err {err_bf16}"

    print("KERNEL_OK")
</pallas_src>

<mosaic_0001>
module attributes {stable_mosaic.version = 11 : i64} {
  func.func @_resize_crop_kernel(%arg0: i32, %arg1: memref<256x64xf32, #tpu.memory_space<vmem>>, %arg2: memref<24x64xf32, #tpu.memory_space<vmem>>, %arg3: memref<64x128xf32, #tpu.memory_space<vmem>>, %arg4: memref<96x128xf32, #tpu.memory_space<vmem>>, %arg5: memref<96x64xf32, #tpu.memory_space<vmem>>) attributes {dimension_semantics = [#tpu.dimension_semantics<parallel>], iteration_bounds = array<i64: 6>, scalar_prefetch = 0 : i64, scratch_operands = 1 : i64, tpu.core_type = #tpu.core_type<tc>, window_params = [{transform_indices = @transform_0, window_bounds = array<i64: 256, 64>}, {pipeline_mode = #tpu.pipeline_mode<synchronous>, transform_indices = @transform_1, window_bounds = array<i64: 24, 64>}, {pipeline_mode = #tpu.pipeline_mode<synchronous>, transform_indices = @transform_2, window_bounds = array<i64: 64, 128>}, {transform_indices = @transform_3, window_bounds = array<i64: 96, 128>}]} {
    %c0 = arith.constant 0 : index
    %c0_0 = arith.constant 0 : index
    %0 = vector.load %arg2[%c0, %c0_0] : memref<24x64xf32, #tpu.memory_space<vmem>>, vector<24x64xf32>
    %c0_1 = arith.constant 0 : index
    %c0_2 = arith.constant 0 : index
    %1 = vector.load %arg1[%c0_1, %c0_2] : memref<256x64xf32, #tpu.memory_space<vmem>>, vector<64x64xf32>
    %cst = arith.constant dense<0.000000e+00> : vector<24x64xf32>
    %2 = tpu.matmul %0, %1, %cst {dimension_numbers = #tpu.dot_dimension_numbers<[1], [0], [0], [1], [0, 0, 1, 1], [], []>} : vector<24x64xf32>, vector<64x64xf32>, vector<24x64xf32> -> vector<24x64xf32>
    %c0_3 = arith.constant 0 : index
    %c0_4 = arith.constant 0 : index
    %3 = vector.load %arg5[%c0_3, %c0_4] : memref<96x64xf32, #tpu.memory_space<vmem>>, vector<24x64xf32>
    tpu.vector_store %arg5[%c0_3, %c0_4], %2 {strides = array<i32>} : memref<96x64xf32, #tpu.memory_space<vmem>>, vector<24x64xf32>,
    %c64 = arith.constant 64 : index
    %c0_5 = arith.constant 0 : index
    %4 = vector.load %arg1[%c64, %c0_5] : memref<256x64xf32, #tpu.memory_space<vmem>>, vector<64x64xf32>
    %cst_6 = arith.constant dense<0.000000e+00> : vector<24x64xf32>
    %5 = tpu.matmul %0, %4, %cst_6 {dimension_numbers = #tpu.dot_dimension_numbers<[1], [0], [0], [1], [0, 0, 1, 1], [], []>} : vector<24x64xf32>, vector<64x64xf32>, vector<24x64xf32> -> vector<24x64xf32>
    %c24 = arith.constant 24 : index
    %c0_7 = arith.constant 0 : index
    %6 = vector.load %arg5[%c24, %c0_7] : memref<96x64xf32, #tpu.memory_space<vmem>>, vector<24x64xf32>
    tpu.vector_store %arg5[%c24, %c0_7], %5 {strides = array<i32>} : memref<96x64xf32, #tpu.memory_space<vmem>>, vector<24x64xf32>,
    %c128 = arith.constant 128 : index
    %c0_8 = arith.constant 0 : index
    %7 = vector.load %arg1[%c128, %c0_8] : memref<256x64xf32, #tpu.memory_space<vmem>>, vector<64x64xf32>
    %cst_9 = arith.constant dense<0.000000e+00> : vector<24x64xf32>
    %8 = tpu.matmul %0, %7, %cst_9 {dimension_numbers = #tpu.dot_dimension_numbers<[1], [0], [0], [1], [0, 0, 1, 1], [], []>} : vector<24x64xf32>, vector<64x64xf32>, vector<24x64xf32> -> vector<24x64xf32>
    %c48 = arith.constant 48 : index
    %c0_10 = arith.constant 0 : index
    %9 = vector.load %arg5[%c48, %c0_10] : memref<96x64xf32, #tpu.memory_space<vmem>>, vector<24x64xf32>
    tpu.vector_store %arg5[%c48, %c0_10], %8 {strides = array<i32>} : memref<96x64xf32, #tpu.memory_space<vmem>>, vector<24x64xf32>,
    %c192 = arith.constant 192 : index
    %c0_11 = arith.constant 0 : index
    %10 = vector.load %arg1[%c192, %c0_11] : memref<256x64xf32, #tpu.memory_space<vmem>>, vector<64x64xf32>
    %cst_12 = arith.constant dense<0.000000e+00> : vector<24x64xf32>
    %11 = tpu.matmul %0, %10, %cst_12 {dimension_numbers = #tpu.dot_dimension_numbers<[1], [0], [0], [1], [0, 0, 1, 1], [], []>} : vector<24x64xf32>, vector<64x64xf32>, vector<24x64xf32> -> vector<24x64xf32>
    %c72 = arith.constant 72 : index
    %c0_13 = arith.constant 0 : index
    %12 = vector.load %arg5[%c72, %c0_13] : memref<96x64xf32, #tpu.memory_space<vmem>>, vector<24x64xf32>
    tpu.vector_store %arg5[%c72, %c0_13], %11 {strides = array<i32>} : memref<96x64xf32, #tpu.memory_space<vmem>>, vector<24x64xf32>,
    %c0_14 = arith.constant 0 : index
    %c0_15 = arith.constant 0 : index
    %13 = vector.load %arg5[%c0_14, %c0_15] : memref<96x64xf32, #tpu.memory_space<vmem>>, vector<96x64xf32>
    %c0_16 = arith.constant 0 : index
    %c0_17 = arith.constant 0 : index
    %14 = vector.load %arg3[%c0_16, %c0_17] : memref<64x128xf32, #tpu.memory_space<vmem>>, vector<64x128xf32>
    %cst_18 = arith.constant dense<0.000000e+00> : vector<96x128xf32>
    %15 = tpu.matmul %13, %14, %cst_18 {dimension_numbers = #tpu.dot_dimension_numbers<[1], [0], [0], [1], [0, 0, 1, 1], [], []>} : vector<96x64xf32>, vector<64x128xf32>, vector<96x128xf32> -> vector<96x128xf32>
    %c0_19 = arith.constant 0 : index
    %c0_20 = arith.constant 0 : index
    %16 = vector.load %arg4[%c0_19, %c0_20] : memref<96x128xf32, #tpu.memory_space<vmem>>, vector<96x128xf32>
    tpu.vector_store %arg4[%c0_19, %c0_20], %15 {strides = array<i32>} : memref<96x128xf32, #tpu.memory_space<vmem>>, vector<96x128xf32>,
    return
  }
  func.func @transform_0(%arg0: i32) -> (i32, i32) {
    %c0_i32 = arith.constant 0 : i32
    %c0_i32_0 = arith.constant 0 : i32
    return %arg0, %c0_i32 : i32, i32
  }
  func.func @transform_1(%arg0: i32) -> (i32, i32) {
    %c0_i32 = arith.constant 0 : i32
    %c0_i32_0 = arith.constant 0 : i32
    %c0_i32_1 = arith.constant 0 : i32
    return %c0_i32, %c0_i32_0 : i32, i32
  }
  func.func @transform_2(%arg0: i32) -> (i32, i32) {
    %c0_i32 = arith.constant 0 : i32
    %c0_i32_0 = arith.constant 0 : i32
    %c0_i32_1 = arith.constant 0 : i32
    return %c0_i32, %c0_i32_0 : i32, i32
  }
  func.func @transform_3(%arg0: i32) -> (i32, i32) {
    %c0_i32 = arith.constant 0 : i32
    %c0_i32_0 = arith.constant 0 : i32
    return %arg0, %c0_i32 : i32, i32
  }
}

</mosaic_0001>

<llo_original>
// kernel: tpu_custom_call.1
$region0: #{tpu_custom_call.1}
  #allocation0 [shape = 'u32[]', space=smem, size = 0x4, offset = 0x4, fixed_abs, tag = 'smem constant byte address 0x4 - core index']
  #allocation1 [shape = 'u32[72,128]{1,0:T(1,128)}', space=vmem, size = 0x9000, scoped, tag = 'internal scratch']
  #allocation2 [shape = 'f32[96,64]{1,0:T(8,128)}', space=vmem, size = 0xc000, scoped, tag = 'scratch operand']
  %s0 = inlined_call_operand.vmem [shape: f32[1536,64], index: 0, kind: input, shape index: {}]
  %s1 = inlined_call_operand.vmem [shape: f32[24,64], index: 1, kind: input, shape index: {}]
  %s2 = inlined_call_operand.vmem [shape: f32[64,128], index: 2, kind: input, shape index: {}]
  %s3 = inlined_call_operand.hbm [shape: f32[576,128], index: 3, kind: output, shape index: {}]
  %s4 = sld [smem:[#allocation0]]
  $region45: #{tpu_custom_call.1} parent=0
    _
  %s6 = ssub.s32 1, %s4
  %s7 = scalar_select 0, %s6, %s4
  $region1: #{tpu_custom_call.1} parent=0
    #allocation3 [shape = 'u8[98304]{0}', space=vmem, size = 0x18000, scoped, tag = 'output window, operand 0']
    #allocation4 [shape = 's32[2]{0}', space=sflag, size = 0x8, scoped, tag = 'scoped memory for tpu_custom_call.1']
    %8 = vsyncpa [#allocation4], 0
    %s9 = scalar_lea.sflag [#allocation4], 1
    %10 = vsyncpa %s9, 0
    loop: start=0, step=1, limit=8
    $region2: #{tpu_custom_call.1} parent=1 // loop_pre_header
      _
    $region3: #{tpu_custom_call.1} parent=1 // loop_header
      %s12 = sphi 0, %s16
      %p13 = scmp.ge.s32.totalorder %s12, 8
      %s22 = sphi 0, %s24
      %s25 = sphi 0, %s22
      %s26 = sphi 0, %s25
      %s42 = sphi 0, %s26
      %s46 = sphi 0, %s46
      %s48 = sphi 0, %s46
      %s49 = sphi 0, %s48
      %s63 = sphi 0, %s49
      %s67 = sphi 0, %s67
      %s69 = sphi 0, %s67
      %s70 = sphi 0, %s69
      %s84 = sphi 0, %s70
      %s90 = sphi 0, %s92
      %s93 = sphi 0, %s90
      %s94 = sphi 0, %s93
      %s110 = sphi 0, %s94
    $region4: #{tpu_custom_call.1} parent=1 // loop_header_branch
      %15 = sbr.rel (%p13) target = $region8
    $region5: #{tpu_custom_call.1} parent=1 // loop_body
      %s17 = ssub.s32 %s12, 1
      %s18 = ssub.s32 %s12, 2
      %s19 = sadd.s32 %s12, 1
      %s20 = ssub.s32 %s12, %s19
      %p21 = scmp.eq.s32.totalorder %s20, 0
      %s23 = sadd.s32 %s22, 1
      %s24 = scalar_select %p21, %s22, %s23
      %p27 = pneg %p21
      %p28 = scmp.eq.s32.totalorder %s12, 5
      %p29 = por %p27, %p28
      %p30 = scmp.ne.s32.totalorder %s22, %s25
      %p31 = scmp.eq.s32.totalorder %s12, 0
      %p32 = por %p30, %p31
      %p33 = scmp.ne.s32.totalorder %s22, %s25
      %p34 = scmp.eq.s32.totalorder %s17, 5
      %p35 = por %p33, %p34
      %p36 = scmp.ne.s32.totalorder %s25, %s26
      %p37 = scmp.eq.s32.totalorder %s17, 0
      %p38 = por %p36, %p37
      %p39 = scmp.ne.s32.totalorder %s25, %s26
      %p40 = scmp.eq.s32.totalorder %s18, 5
      %p41 = por %p39, %p40
      %p43 = scmp.ne.s32.totalorder %s26, %s42
      %p44 = scmp.eq.s32.totalorder %s18, 0
      %p45 = por %p43, %p44
      %s47 = sadd.s32 %s46, 1
      %p50 = scmp.eq.s32.totalorder %s12, 5
      %p51 = scmp.ne.s32.totalorder %s46, %s48
      %p52 = scmp.eq.s32.totalorder %s12, 0
      %p53 = por %p51, %p52
      %p54 = scmp.ne.s32.totalorder %s46, %s48
      %p55 = scmp.eq.s32.totalorder %s17, 5
      %p56 = por %p54, %p55
      %p57 = scmp.ne.s32.totalorder %s48, %s49
      %p58 = scmp.eq.s32.totalorder %s17, 0
      %p59 = por %p57, %p58
      %p60 = scmp.ne.s32.totalorder %s48, %s49
      %p61 = scmp.eq.s32.totalorder %s18, 5
      %p62 = por %p60, %p61
      %p64 = scmp.ne.s32.totalorder %s49, %s63
      %p65 = scmp.eq.s32.totalorder %s18, 0
      %p66 = por %p64, %p65
      %s68 = sadd.s32 %s67, 1
      %p71 = scmp.eq.s32.totalorder %s12, 5
      %p72 = scmp.ne.s32.totalorder %s67, %s69
      %p73 = scmp.eq.s32.totalorder %s12, 0
      %p74 = por %p72, %p73
      %p75 = scmp.ne.s32.totalorder %s67, %s69
      %p76 = scmp.eq.s32.totalorder %s17, 5
      %p77 = por %p75, %p76
      %p78 = scmp.ne.s32.totalorder %s69, %s70
      %p79 = scmp.eq.s32.totalorder %s17, 0
      %p80 = por %p78, %p79
      %p81 = scmp.ne.s32.totalorder %s69, %s70
      %p82 = scmp.eq.s32.totalorder %s18, 5
      %p83 = por %p81, %p82
      %p85 = scmp.ne.s32.totalorder %s70, %s84
      %p86 = scmp.eq.s32.totalorder %s18, 0
      %p87 = por %p85, %p86
      %s88 = ssub.s32 %s12, %s19
      %p89 = scmp.eq.s32.totalorder %s88, 0
      %s91 = sadd.s32 %s90, 1
      %s92 = scalar_select %p89, %s90, %s91
      %p95 = pneg %p89
      %p96 = scmp.eq.s32.totalorder %s12, 5
      %p97 = por %p95, %p96
      %p98 = scmp.ne.s32.totalorder %s90, %s93
      %p99 = scmp.eq.s32.totalorder %s12, 0
      %p100 = por %p98, %p99
      %p101 = scmp.ne.s32.totalorder %s90, %s93
      %p102 = scmp.eq.s32.totalorder %s17, 5
      %p103 = por %p101, %p102
      %p104 = scmp.ne.s32.totalorder %s93, %s94
      %p105 = scmp.eq.s32.totalorder %s17, 0
      %p106 = por %p104, %p105
      %p107 = scmp.ne.s32.totalorder %s93, %s94
      %p108 = scmp.eq.s32.totalorder %s18, 5
      %p109 = por %p107, %p108
      %p111 = scmp.ne.s32.totalorder %s94, %s110
      %p112 = scmp.eq.s32.totalorder %s18, 0
      %p113 = por %p111, %p112
      %p114 = scmp.le.s32.totalorder 1, %s12
      %p115 = scmp.lt.s32.totalorder %s12, 7
      %p116 = pnand %p114, %p115
      %p117 = pneg %p116
      // Predicated region
      $region9: #{tpu_custom_call.1} parent=5 // pred_check
        _
      $region10: #{tpu_custom_call.1} parent=5 // pred_check_branch
        %119 = sbr.rel (%p116) target = $region12
      $region11: #{tpu_custom_call.1} parent=5 // pred_region
        %s120 = ssub.s32 %s12, 1
        // Predicated region
        $region13: #{tpu_custom_call.1} parent=11 // pred_check
          %p121 = pneg %p59
        $region14: #{tpu_custom_call.1} parent=11 // pred_check_branch
          %123 = sbr.rel (%p121) target = $region16
        $region15: #{tpu_custom_call.1} parent=11 // pred_region
          _
        $region16: #{tpu_custom_call.1} parent=11 // pred_fallthru
          _
        // Predicated region
        $region17: #{tpu_custom_call.1} parent=11 // pred_check
          %p124 = pneg %p80
        $region18: #{tpu_custom_call.1} parent=11 // pred_check_branch
          %126 = sbr.rel (%p124) target = $region20
        $region19: #{tpu_custom_call.1} parent=11 // pred_region
          _
        $region20: #{tpu_custom_call.1} parent=11 // pred_fallthru
          _
      $region12: #{tpu_custom_call.1} parent=5 // pred_fallthru
        _
      %p127 = scmp.lt.s32.totalorder %s12, 6
      // Predicated region
      $region21: #{tpu_custom_call.1} parent=5 // pred_check
        %p128 = pneg %p127
      $region22: #{tpu_custom_call.1} parent=5 // pred_check_branch
        %130 = sbr.rel (%p128) target = $region24
      $region23: #{tpu_custom_call.1} parent=5 // pred_region
        // Predicated region
        $region25: #{tpu_custom_call.1} parent=23 // pred_check
          %p131 = pneg %p32
        $region26: #{tpu_custom_call.1} parent=23 // pred_check_branch
          %133 = sbr.rel (%p131) target = $region28
        $region27: #{tpu_custom_call.1} parent=23 // pred_region
          %s134 = smul.u32 32, %s12
          %p135 = scmp.lt.s32.totalorder %s134, 191
          %s136 = scalar_select %p135, %s134, 191
          %s137 = smul.addr %s136, 8
          %s138 = scalar_lea.vmem %s0, %s137
          %s139 = smul.u32 32, %s12
        $region28: #{tpu_custom_call.1} parent=23 // pred_fallthru
          _
      $region24: #{tpu_custom_call.1} parent=5 // pred_fallthru
        _
      %p140 = scmp.le.s32.totalorder 1, %s12
      %p141 = scmp.lt.s32.totalorder %s12, 7
      %p142 = pnand %p140, %p141
      %p143 = pneg %p142
      // Predicated region
      $region29: #{tpu_custom_call.1} parent=5 // pred_check
        _
      $region30: #{tpu_custom_call.1} parent=5 // pred_check_branch
        %145 = sbr.rel (%p142) target = $region32
      $region31: #{tpu_custom_call.1} parent=5 // pred_region
        %s146 = ssub.s32 %s12, 1
        %s147 = smul.u32 32, %s17
        %p148 = scmp.lt.s32.totalorder %s147, 191
        %s149 = scalar_select %p148, %s147, 191
        %s150 = smul.addr %s149, 8
        %s151 = scalar_lea.vmem %s0, %s150
        %p152 = pneg %p38
        %p153 = pneg %p35
        %p154 = pneg %p59
        %p155 = pneg %p56
        %p156 = pneg %p80
        %p157 = pneg %p77
        %p158 = pneg %p106
        %p159 = pneg %p103
        %s160 = sand.u32 %s93, 1
        %s161 = scalar_lea.sflag [#allocation4], %s160
        %s162 = sand.u32 %s93, 1
        %s163 = smul.addr %s162, 96
        %s164 = scalar_lea.vmem [#allocation3], %s163
        %s165 = smul.u32 32, %s17
        %p166 = scmp.lt.s32.totalorder %s165, 191
        %s167 = scalar_select %p166, %s165, 191
        %s168 = smul.addr %s167, 8
        %s169 = scalar_lea.vmem %s0, %s168
        %s170 = smul.u32 32, %s17
        %s171 = smul.u32 12, %s17
        %v172 = vld [vmem:[%s1] sm:$0xff]
        %v173 = vld [vmem:[%s1 + $0x8] sm:$0xff]
        %v174 = vld [vmem:[%s1 + $0x10] sm:$0xff]
        %v175 = vld [vmem:[%s169] sm:$0xff]
        %v176 = vld [vmem:[%s169 + $0x8] sm:$0xff]
        %v177 = vld [vmem:[%s169 + $0x10] sm:$0xff]
        %v178 = vld [vmem:[%s169 + $0x18] sm:$0xff]
        %v179 = vld [vmem:[%s169 + $0x20] sm:$0xff]
        %v180 = vld [vmem:[%s169 + $0x28] sm:$0xff]
        %v181 = vld [vmem:[%s169 + $0x30] sm:$0xff]
        %v182 = vld [vmem:[%s169 + $0x38] sm:$0xff]
        %vm183 = vcmask 523264
        %v185 = vsel %vm183, %v172, 0
        %v188 = vsel %vm183, %v173, 0
        %v191 = vsel %vm183, %v174, 0
        %193 = vmatpush.msra.mxu0 0.0
        %194 = vmatpush.msra.mxu0 0.0
        %195 = vmatpush.msra.mxu0 0.0
        %196 = vmatpush.msra.mxu0 0.0
        %197 = vmatpush.msra.mxu0 0.0
        %198 = vmatpush.msra.mxu0 0.0
        %199 = vmatpush.msra.mxu0 0.0
        %200 = vmatpush.msra.mxu0 0.0
        %201 = vmatpush.msra.mxu0 %v182
        %202 = vmatpush.msra.mxu0 %v181
        %203 = vmatpush.msra.mxu0 %v180
        %204 = vmatpush.msra.mxu0 %v179
        %205 = vmatpush.msra.mxu0 %v178
        %206 = vmatpush.msra.mxu0 %v177
        %207 = vmatpush.msra.mxu0 %v176
        %208 = vmatpush.msra.mxu0 %v175
        %209 = vmatmul.f32.gmra.mxu0 %v185
        %v210 = vpop.f32.mrf.mxu0
        %v211 = vadd.f32 0.0, %v210
        %212 = vmatmul.f32.gmra.mxu0 %v188
        %v213 = vpop.f32.mrf.mxu0
        %v214 = vadd.f32 0.0, %v213
        %215 = vmatmul.f32.gmra.mxu0 %v191
        %v216 = vpop.f32.mrf.mxu0
        %v217 = vadd.f32 0.0, %v216
        %218 = vdwg.mxu0
        %219 = vst.msk [vmem:[#allocation2] sm:$0xff] %vm183, %v211
        %220 = vst.msk [vmem:[#allocation2 + $0x8] sm:$0xff] %vm183, %v214
        %221 = vst.msk [vmem:[#allocation2 + $0x10] sm:$0xff] %vm183, %v217
        %v222 = vld [vmem:[%s169 + $0x40] sm:$0xff]
        %v223 = vld [vmem:[%s169 + $0x48] sm:$0xff]
        %v224 = vld [vmem:[%s169 + $0x50] sm:$0xff]
        %v225 = vld [vmem:[%s169 + $0x58] sm:$0xff]
        %v226 = vld [vmem:[%s169 + $0x60] sm:$0xff]
        %v227 = vld [vmem:[%s169 + $0x68] sm:$0xff]
        %v228 = vld [vmem:[%s169 + $0x70] sm:$0xff]
        %v229 = vld [vmem:[%s169 + $0x78] sm:$0xff]
        %230 = vmatpush.msra.mxu0 0.0
        %231 = vmatpush.msra.mxu0 0.0
        %232 = vmatpush.msra.mxu0 0.0
        %233 = vmatpush.msra.mxu0 0.0
        %234 = vmatpush.msra.mxu0 0.0
        %235 = vmatpush.msra.mxu0 0.0
        %236 = vmatpush.msra.mxu0 0.0
        %237 = vmatpush.msra.mxu0 0.0
        %238 = vmatpush.msra.mxu0 %v229
        %239 = vmatpush.msra.mxu0 %v228
        %240 = vmatpush.msra.mxu0 %v227
        %241 = vmatpush.msra.mxu0 %v226
        %242 = vmatpush.msra.mxu0 %v225
        %243 = vmatpush.msra.mxu0 %v224
        %244 = vmatpush.msra.mxu0 %v223
        %245 = vmatpush.msra.mxu0 %v222
        %246 = vmatmul.f32.gmra.mxu0 %v185
        %v247 = vpop.f32.mrf.mxu0
        %v248 = vadd.f32 0.0, %v247
        %249 = vmatmul.f32.gmra.mxu0 %v188
        %v250 = vpop.f32.mrf.mxu0
        %v251 = vadd.f32 0.0, %v250
        %252 = vmatmul.f32.gmra.mxu0 %v191
        %v253 = vpop.f32.mrf.mxu0
        %v254 = vadd.f32 0.0, %v253
        %255 = vdwg.mxu0
        %256 = vst.msk [vmem:[#allocation2 + $0x18] sm:$0xff] %vm183, %v248
        %257 = vst.msk [vmem:[#allocation2 + $0x20] sm:$0xff] %vm183, %v251
        %258 = vst.msk [vmem:[#allocation2 + $0x28] sm:$0xff] %vm183, %v254
        %v259 = vld [vmem:[%s169 + $0x80] sm:$0xff]
        %v260 = vld [vmem:[%s169 + $0x88] sm:$0xff]
        %v261 = vld [vmem:[%s169 + $0x90] sm:$0xff]
        %v262 = vld [vmem:[%s169 + $0x98] sm:$0xff]
        %v263 = vld [vmem:[%s169 + $0xa0] sm:$0xff]
        %v264 = vld [vmem:[%s169 + $0xa8] sm:$0xff]
        %v265 = vld [vmem:[%s169 + $0xb0] sm:$0xff]
        %v266 = vld [vmem:[%s169 + $0xb8] sm:$0xff]
        %267 = vmatpush.msra.mxu0 0.0
        %268 = vmatpush.msra.mxu0 0.0
        %269 = vmatpush.msra.mxu0 0.0
        %270 = vmatpush.msra.mxu0 0.0
        %271 = vmatpush.msra.mxu0 0.0
        %272 = vmatpush.msra.mxu0 0.0
        %273 = vmatpush.msra.mxu0 0.0
        %274 = vmatpush.msra.mxu0 0.0
        %275 = vmatpush.msra.mxu0 %v266
        %276 = vmatpush.msra.mxu0 %v265
        %277 = vmatpush.msra.mxu0 %v264
        %278 = vmatpush.msra.mxu0 %v263
        %279 = vmatpush.msra.mxu0 %v262
        %280 = vmatpush.msra.mxu0 %v261
        %281 = vmatpush.msra.mxu0 %v260
        %282 = vmatpush.msra.mxu0 %v259
        %283 = vmatmul.f32.gmra.mxu0 %v185
        %v284 = vpop.f32.mrf.mxu0
        %v285 = vadd.f32 0.0, %v284
        %286 = vmatmul.f32.gmra.mxu0 %v188
        %v287 = vpop.f32.mrf.mxu0
        %v288 = vadd.f32 0.0, %v287
        %289 = vmatmul.f32.gmra.mxu0 %v191
        %v290 = vpop.f32.mrf.mxu0
        %v291 = vadd.f32 0.0, %v290
        %292 = vdwg.mxu0
        %293 = vst.msk [vmem:[#allocation2 + $0x30] sm:$0xff] %vm183, %v285
        %294 = vst.msk [vmem:[#allocation2 + $0x38] sm:$0xff] %vm183, %v288
        %295 = vst.msk [vmem:[#allocation2 + $0x40] sm:$0xff] %vm183, %v291
        %v296 = vld [vmem:[%s169 + $0xc0] sm:$0xff]
        %v297 = vld [vmem:[%s169 + $0xc8] sm:$0xff]
        %v298 = vld [vmem:[%s169 + $0xd0] sm:$0xff]
        %v299 = vld [vmem:[%s169 + $0xd8] sm:$0xff]
        %v300 = vld [vmem:[%s169 + $0xe0] sm:$0xff]
        %v301 = vld [vmem:[%s169 + $0xe8] sm:$0xff]
        %v302 = vld [vmem:[%s169 + $0xf0] sm:$0xff]
        %v303 = vld [vmem:[%s169 + $0xf8] sm:$0xff]
        %304 = vmatpush.msra.mxu0 0.0
        %305 = vmatpush.msra.mxu0 0.0
        %306 = vmatpush.msra.mxu0 0.0
        %307 = vmatpush.msra.mxu0 0.0
        %308 = vmatpush.msra.mxu0 0.0
        %309 = vmatpush.msra.mxu0 0.0
        %310 = vmatpush.msra.mxu0 0.0
        %311 = vmatpush.msra.mxu0 0.0
        %312 = vmatpush.msra.mxu0 %v303
        %313 = vmatpush.msra.mxu0 %v302
        %314 = vmatpush.msra.mxu0 %v301
        %315 = vmatpush.msra.mxu0 %v300
        %316 = vmatpush.msra.mxu0 %v299
        %317 = vmatpush.msra.mxu0 %v298
        %318 = vmatpush.msra.mxu0 %v297
        %319 = vmatpush.msra.mxu0 %v296
        %320 = vmatmul.f32.gmra.mxu0 %v185
        %v321 = vpop.f32.mrf.mxu0
        %v322 = vadd.f32 0.0, %v321
        %323 = vmatmul.f32.gmra.mxu0 %v188
        %v324 = vpop.f32.mrf.mxu0
        %v325 = vadd.f32 0.0, %v324
        %326 = vmatmul.f32.gmra.mxu0 %v191
        %v327 = vpop.f32.mrf.mxu0
        %v328 = vadd.f32 0.0, %v327
        %329 = vdwg.mxu0
        %330 = vst.msk [vmem:[#allocation2 + $0x48] sm:$0xff] %vm183, %v322
        %331 = vst.msk [vmem:[#allocation2 + $0x50] sm:$0xff] %vm183, %v325
        %332 = vst.msk [vmem:[#allocation2 + $0x58] sm:$0xff] %vm183, %v328
        %v333 = vld [vmem:[#allocation2] sm:$0xff]
        %v334 = vld [vmem:[#allocation2 + $0x8] sm:$0xff]
        %v335 = vld [vmem:[#allocation2 + $0x10] sm:$0xff]
        %v336 = vld [vmem:[#allocation2 + $0x18] sm:$0xff]
        %v337 = vld [vmem:[#allocation2 + $0x20] sm:$0xff]
        %v338 = vld [vmem:[#allocation2 + $0x28] sm:$0xff]
        %v339 = vld [vmem:[#allocation2 + $0x30] sm:$0xff]
        %v340 = vld [vmem:[#allocation2 + $0x38] sm:$0xff]
        %v341 = vld [vmem:[#allocation2 + $0x40] sm:$0xff]
        %v342 = vld [vmem:[#allocation2 + $0x48] sm:$0xff]
        %v343 = vld [vmem:[#allocation2 + $0x50] sm:$0xff]
        %v344 = vld [vmem:[#allocation2 + $0x58] sm:$0xff]
        %v345 = vld [vmem:[%s2] sm:$0xff]
        %v346 = vld [vmem:[%s2 + $0x8] sm:$0xff]
        %v347 = vld [vmem:[%s2 + $0x10] sm:$0xff]
        %v348 = vld [vmem:[%s2 + $0x18] sm:$0xff]
        %v349 = vld [vmem:[%s2 + $0x20] sm:$0xff]
        %v350 = vld [vmem:[%s2 + $0x28] sm:$0xff]
        %v351 = vld [vmem:[%s2 + $0x30] sm:$0xff]
        %v352 = vld [vmem:[%s2 + $0x38] sm:$0xff]
        %v354 = vsel %vm183, %v333, 0
        %v357 = vsel %vm183, %v334, 0
        %v360 = vsel %vm183, %v335, 0
        %v363 = vsel %vm183, %v336, 0
        %v366 = vsel %vm183, %v337, 0
        %v369 = vsel %vm183, %v338, 0
        %v372 = vsel %vm183, %v339, 0
        %v375 = vsel %vm183, %v340, 0
        %v378 = vsel %vm183, %v341, 0
        %v381 = vsel %vm183, %v342, 0
        %v384 = vsel %vm183, %v343, 0
        %v387 = vsel %vm183, %v344, 0
        %389 = vmatpush.msra.mxu0 0.0
        %390 = vmatpush.msra.mxu0 0.0
        %391 = vmatpush.msra.mxu0 0.0
        %392 = vmatpush.msra.mxu0 0.0
        %393 = vmatpush.msra.mxu0 0.0
        %394 = vmatpush.msra.mxu0 0.0
        %395 = vmatpush.msra.mxu0 0.0
        %396 = vmatpush.msra.mxu0 0.0
        %397 = vmatpush.msra.mxu0 %v352
        %398 = vmatpush.msra.mxu0 %v351
        %399 = vmatpush.msra.mxu0 %v350
        %400 = vmatpush.msra.mxu0 %v349
        %401 = vmatpush.msra.mxu0 %v348
        %402 = vmatpush.msra.mxu0 %v347
        %403 = vmatpush.msra.mxu0 %v346
        %404 = vmatpush.msra.mxu0 %v345
        %405 = vmatmul.f32.gmra.mxu0 %v354
        %v406 = vpop.f32.mrf.mxu0
        %v407 = vadd.f32 0.0, %v406
        %408 = vmatmul.f32.gmra.mxu0 %v357
        %v409 = vpop.f32.mrf.mxu0
        %v410 = vadd.f32 0.0, %v409
        %411 = vmatmul.f32.gmra.mxu0 %v360
        %v412 = vpop.f32.mrf.mxu0
        %v413 = vadd.f32 0.0, %v412
        %414 = vmatmul.f32.gmra.mxu0 %v363
        %v415 = vpop.f32.mrf.mxu0
        %v416 = vadd.f32 0.0, %v415
        %417 = vmatmul.f32.gmra.mxu0 %v366
        %v418 = vpop.f32.mrf.mxu0
        %v419 = vadd.f32 0.0, %v418
        %420 = vmatmul.f32.gmra.mxu0 %v369
        %v421 = vpop.f32.mrf.mxu0
        %v422 = vadd.f32 0.0, %v421
        %423 = vmatmul.f32.gmra.mxu0 %v372
        %v424 = vpop.f32.mrf.mxu0
        %v425 = vadd.f32 0.0, %v424
        %426 = vmatmul.f32.gmra.mxu0 %v375
        %v427 = vpop.f32.mrf.mxu0
        %v428 = vadd.f32 0.0, %v427
        %429 = vmatmul.f32.gmra.mxu0 %v378
        %v430 = vpop.f32.mrf.mxu0
        %v431 = vadd.f32 0.0, %v430
        %432 = vmatmul.f32.gmra.mxu0 %v381
        %v433 = vpop.f32.mrf.mxu0
        %v434 = vadd.f32 0.0, %v433
        %435 = vmatmul.f32.gmra.mxu0 %v384
        %v436 = vpop.f32.mrf.mxu0
        %v437 = vadd.f32 0.0, %v436
        %438 = vmatmul.f32.gmra.mxu0 %v387
        %v439 = vpop.f32.mrf.mxu0
        %v440 = vadd.f32 0.0, %v439
        %441 = vdwg.mxu0
        %442 = vst [vmem:[%s164] sm:$0xff] %v407
        %443 = vst [vmem:[%s164 + $0x8] sm:$0xff] %v410
        %444 = vst [vmem:[%s164 + $0x10] sm:$0xff] %v413
        %445 = vst [vmem:[%s164 + $0x18] sm:$0xff] %v416
        %446 = vst [vmem:[%s164 + $0x20] sm:$0xff] %v419
        %447 = vst [vmem:[%s164 + $0x28] sm:$0xff] %v422
        %448 = vst [vmem:[%s164 + $0x30] sm:$0xff] %v425
        %449 = vst [vmem:[%s164 + $0x38] sm:$0xff] %v428
        %450 = vst [vmem:[%s164 + $0x40] sm:$0xff] %v431
        %451 = vst [vmem:[%s164 + $0x48] sm:$0xff] %v434
        %452 = vst [vmem:[%s164 + $0x50] sm:$0xff] %v437
        %453 = vst [vmem:[%s164 + $0x58] sm:$0xff] %v440
        %s454 = sand.u32 %s93, 1
        %s455 = scalar_lea.sflag [#allocation4], %s454
        %s456 = sand.u32 %s93, 1
        %s457 = smul.addr %s456, 96
        %s458 = scalar_lea.vmem [#allocation3], %s457
        // Predicated region
        $region33: #{tpu_custom_call.1} parent=31 // pred_check
          %p459 = pneg %p103
        $region34: #{tpu_custom_call.1} parent=31 // pred_check_branch
          %461 = sbr.rel (%p459) target = $region36
        $region35: #{tpu_custom_call.1} parent=31 // pred_region
          %s462 = smul.u32 12, %s17
          %464 = vsyncadd %s455, 0
          %s465 = smul.addr %s462, 8
          %s466 = scalar_lea.hbm %s3, %s465
          %s467 = sshll.u32 %s458, 4
          %s468 = int_to_ptr.vmem [resolvable:$true] %s467
          %s469 = sshll.u32 %s466, 4
          %s470 = int_to_ptr.hbm [resolvable:$true] %s469
          %475 = dma.vmem_to_hbm [thread:$0]  %s468, 1536, %s470, %s455, 128, 128, 8
        $region36: #{tpu_custom_call.1} parent=31 // pred_fallthru
          _
      $region32: #{tpu_custom_call.1} parent=5 // pred_fallthru
        _
      %p476 = scmp.le.s32.totalorder 2, %s12
      // Predicated region
      $region37: #{tpu_custom_call.1} parent=5 // pred_check
        %p477 = pneg %p476
      $region38: #{tpu_custom_call.1} parent=5 // pred_check_branch
        %479 = sbr.rel (%p477) target = $region40
      $region39: #{tpu_custom_call.1} parent=5 // pred_region
        %s480 = ssub.s32 %s12, 2
        // Predicated region
        $region41: #{tpu_custom_call.1} parent=39 // pred_check
          %p481 = pneg %p109
        $region42: #{tpu_custom_call.1} parent=39 // pred_check_branch
          %483 = sbr.rel (%p481) target = $region44
        $region43: #{tpu_custom_call.1} parent=39 // pred_region
          %s484 = sand.u32 %s94, 1
          %s485 = scalar_lea.sflag [#allocation4], %s484
          %s486 = sand.u32 %s94, 1
          %s487 = smul.addr %s486, 96
          %s488 = scalar_lea.vmem [#allocation3], %s487
          %490 = dma.done %s485, 1536
        $region44: #{tpu_custom_call.1} parent=39 // pred_fallthru
          _
      $region40: #{tpu_custom_call.1} parent=5 // pred_fallthru
        _
    $region6: #{tpu_custom_call.1} parent=1 // loop_footer
      %s16 = sadd.s32 1, %s12
    $region7: #{tpu_custom_call.1} parent=1 // loop_footer_branch
      %11 = sbr.rel target = $region3
    $region8: #{tpu_custom_call.1} parent=1 // loop_exit
      _
    %491 = vsyncpa [#allocation4], 1
    %s492 = scalar_lea.sflag [#allocation4], 1
    %493 = vsyncpa %s492, 1

</llo_original>
